<compile_context>
chip_gen: v7x
topology: tpu7x:2x2x1
jax: 0.10.0
libtpu: 0.0.40
codegen_flags: <defaults>
</compile_context>

<pallas_src>
import jax
import jax.numpy as jnp
from jax import lax
from jax.experimental import pallas as pl
from jax.experimental.pallas import tpu as pltpu


def _euclidean_distance_kernel(l_ref, r_ref, mask_ref, out_ref):
    # l_ref: (tile, D); r_ref: (tile|1, D|1); mask_ref/out_ref: (1, tile)
    l = l_ref[...].astype(jnp.float32)
    r = r_ref[...].astype(jnp.float32)
    diff = l - r                       # VPU broadcast handles the (.,1)/(1,.) cases
    sq = diff * diff                   # (tile, D) f32

    # Row sums produced directly in the lane axis:  (1, D) @ (tile, D)^T -> (1, tile).
    # sq is split into a bf16-exact high part plus a small residual so the result is
    # ~f32-accurate even if the MXU lowering runs single bf16 passes; if the backend
    # does full-precision f32 matmul the split is exact (hi + lo == sq).
    dims = (((1,), (1,)), ((), ()))
    ones = jnp.ones((1, sq.shape[-1]), dtype=jnp.float32)
    sq_hi = sq.astype(jnp.bfloat16).astype(jnp.float32)
    sq_lo = sq - sq_hi
    ssq = (lax.dot_general(ones, sq_hi, dims, preferred_element_type=jnp.float32)
           + lax.dot_general(ones, sq_lo, dims, preferred_element_type=jnp.float32))

    dist = jnp.sqrt(jnp.maximum(ssq, 0.0))                 # (1, tile), lane-dense
    # mask == 0  ->  1e18   (matches `distances[~left_mask] = 1e18`)
    out_ref[...] = jnp.where(mask_ref[...] != 0, dist, jnp.float32(1e18))


def euclidean_distance(left, right, left_mask, *, dim=-1, tm=2048,
                       vmem_tile_budget_bytes=20 * 1024 * 1024):
    """left: (..., D); right broadcastable to left with size 1 or D along the last
    axis; left_mask: bool of shape left.shape[:-1].
    Returns (distances f32 of shape left.shape[:-1], left_mask)."""
    assert dim in (-1, left.ndim - 1), "this kernel reduces over the last axis"
    assert right.shape[dim] in (1, left.shape[dim])

    lead = left.shape[:-1]
    D = left.shape[-1]
    M = 1
    for s in lead:
        M *= s
    rc = right.shape[-1]

    l2 = left.reshape(M, D)
    # Never broadcast `right` along D in HBM.
    if all(s == 1 for s in right.shape[:-1]):
        r2 = right.reshape(1, rc)          # single shared row, fetched once per step
        shared_right = True
    else:
        r2 = jnp.broadcast_to(right, lead + (rc,)).reshape(M, rc)
        shared_right = False
    m2 = left_mask.reshape(1, M).astype(jnp.int32)

    # Row-tile selection: largest tile whose double-buffered streaming footprint
    # stays under the budget (fits v7x's smaller VMEM), multiple of 128 so the
    # (1, tile) output block is lane-dense; keep >=2 grid blocks when there is
    # enough work so both v7x TensorCores get a share.
    bytes_per_row = (D * left.dtype.itemsize
                     + (0 if shared_right else rc * right.dtype.itemsize)
                     + 4 + 4)                                   # + mask + output
    cap = max(128, (vmem_tile_budget_bytes // (2 * bytes_per_row)) // 128 * 128)
    tile = min(tm, cap)
    if M >= 256:
        tile = min(tile, ((M + 1) // 2 + 127) // 128 * 128)     # >= 2 grid blocks
    if M <= tile:
        tile = M                                                # single full block
    grid = (pl.cdiv(M, tile),)

    if shared_right:
        r_spec = pl.BlockSpec((1, rc), lambda i: (0, 0))
    else:
        r_spec = pl.BlockSpec((tile, rc), lambda i: (i, 0))

    cost = pl.CostEstimate(
        flops=3 * M * D,
        transcendentals=M,
        bytes_accessed=int(M * D * left.dtype.itemsize
                           + r2.size * right.dtype.itemsize
                           + M * 4 + M * 4),
    )

    out = pl.pallas_call(
        _euclidean_distance_kernel,
        out_shape=jax.ShapeDtypeStruct((1, M), jnp.float32),
        grid_spec=pltpu.PrefetchScalarGridSpec(
            num_scalar_prefetch=0,
            grid=grid,
            in_specs=[
                pl.BlockSpec((tile, D), lambda i: (i, 0)),
                r_spec,
                pl.BlockSpec((1, tile), lambda i: (0, i)),
            ],
            out_specs=pl.BlockSpec((1, tile), lambda i: (0, i)),
        ),
        compiler_params=pltpu.CompilerParams(
            dimension_semantics=("parallel",),
            vmem_limit_bytes=32 * 1024 * 1024,
        ),
        cost_estimate=cost,
    )(l2, r2, m2)

    distances = out.reshape(lead)
    return distances, left_mask


def _reference(left, right, left_mask):
    d = jnp.sqrt(jnp.sum((left - right) ** 2, axis=-1))
    return jnp.where(left_mask, d, jnp.float32(1e18))


if __name__ == "__main__":
    key = jax.random.PRNGKey(0)
    ks = jax.random.split(key, 8)

    # Case 1: right has size 1 along the reduced dim (broadcast inside the kernel).
    B, S, D = 2, 8, 32
    left = jax.random.normal(ks[0], (B, S, D), dtype=jnp.float32)
    right = jax.random.normal(ks[1], (B, S, 1), dtype=jnp.float32)
    mask = jax.random.bernoulli(ks[2], 0.7, (B, S))

    dist, out_mask = euclidean_distance(left, right, mask, dim=-1)
    dist = jax.block_until_ready(dist)
    ref = _reference(left, right, mask)
    assert dist.shape == (B, S) and out_mask.shape == (B, S)
    assert jnp.allclose(dist, ref, rtol=1e-4, atol=1e-4), "case1 mismatch vs reference"

    # Case 2: a single shared right vector (never broadcast in HBM).
    right2 = jax.random.normal(ks[3], (1, 1, D), dtype=jnp.float32)
    dist2, _ = euclidean_distance(left, right2, mask, dim=-1)
    dist2 = jax.block_until_ready(dist2)
    ref2 = _reference(left, right2, mask)
    assert jnp.allclose(dist2, ref2, rtol=1e-4, atol=1e-4), "case2 mismatch vs reference"

    # Case 3: larger M -> multi-block grid with a ragged last block, full-D right.
    B3, S3 = 2, 400
    left3 = jax.random.normal(ks[4], (B3, S3, D), dtype=jnp.float32)
    right3 = jax.random.normal(ks[5], (B3, S3, D), dtype=jnp.float32)
    mask3 = jax.random.bernoulli(ks[6], 0.5, (B3, S3))
    dist3, _ = euclidean_distance(left3, right3, mask3, dim=-1)
    dist3 = jax.block_until_ready(dist3)
    ref3 = _reference(left3, right3, mask3)
    assert dist3.shape == (B3, S3)
    assert jnp.allclose(dist3, ref3, rtol=1e-4, atol=1e-4), "case3 mismatch vs reference"

    print("KERNEL_OK")
</pallas_src>

<mosaic_0001>
module attributes {stable_mosaic.version = 11 : i64} {
  func.func @_euclidean_distance_kernel(%arg0: i32, %arg1: memref<16x32xf32, #tpu.memory_space<vmem>>, %arg2: memref<16x1xf32, #tpu.memory_space<vmem>>, %arg3: memref<1x16xi32, #tpu.memory_space<vmem>>, %arg4: memref<1x16xf32, #tpu.memory_space<vmem>>) attributes {dimension_semantics = [#tpu.dimension_semantics<parallel>], iteration_bounds = array<i64: 1>, scalar_prefetch = 0 : i64, scratch_operands = 0 : i64, tpu.core_type = #tpu.core_type<tc>, window_params = [{transform_indices = @transform_0, window_bounds = array<i64: 16, 32>}, {transform_indices = @transform_1, window_bounds = array<i64: 16, 1>}, {transform_indices = @transform_2, window_bounds = array<i64: 1, 16>}, {transform_indices = @transform_3, window_bounds = array<i64: 1, 16>}]} {
    %c0 = arith.constant 0 : index
    %c0_0 = arith.constant 0 : index
    %0 = vector.load %arg1[%c0, %c0_0] : memref<16x32xf32, #tpu.memory_space<vmem>>, vector<16x32xf32>
    %c0_1 = arith.constant 0 : index
    %c0_2 = arith.constant 0 : index
    %1 = vector.load %arg2[%c0_1, %c0_2] : memref<16x1xf32, #tpu.memory_space<vmem>>, vector<16x1xf32>
    %2 = vector.broadcast %1 : vector<16x1xf32> to vector<16x32xf32>
    %3 = arith.subf %0, %2 : vector<16x32xf32>
    %4 = arith.mulf %3, %3 : vector<16x32xf32>
    %cst = arith.constant 1.000000e+00 : f32
    %5 = vector.broadcast %cst : f32 to vector<1x32xf32>
    %6 = arith.truncf %4 : vector<16x32xf32> to vector<16x32xbf16>
    %7 = arith.extf %6 : vector<16x32xbf16> to vector<16x32xf32>
    %8 = arith.subf %4, %7 : vector<16x32xf32>
    %cst_3 = arith.constant dense<0.000000e+00> : vector<1x16xf32>
    %9 = tpu.matmul %5, %7, %cst_3 {dimension_numbers = #tpu.dot_dimension_numbers<[1], [1], [0], [0], [0, 0, 1, 0], [], []>} : vector<1x32xf32>, vector<16x32xf32>, vector<1x16xf32> -> vector<1x16xf32>
    %cst_4 = arith.constant dense<0.000000e+00> : vector<1x16xf32>
    %10 = tpu.matmul %5, %8, %cst_4 {dimension_numbers = #tpu.dot_dimension_numbers<[1], [1], [0], [0], [0, 0, 1, 0], [], []>} : vector<1x32xf32>, vector<16x32xf32>, vector<1x16xf32> -> vector<1x16xf32>
    %11 = arith.addf %9, %10 : vector<1x16xf32>
    %cst_5 = arith.constant 0.000000e+00 : f32
    %12 = vector.broadcast %cst_5 : f32 to vector<1x16xf32>
    %13 = arith.maximumf %11, %12 : vector<1x16xf32>
    %14 = math.sqrt %13 : vector<1x16xf32>
    %c0_6 = arith.constant 0 : index
    %c0_7 = arith.constant 0 : index
    %15 = vector.load %arg3[%c0_6, %c0_7] : memref<1x16xi32, #tpu.memory_space<vmem>>, vector<1x16xi32>
    %c0_i32 = arith.constant 0 : i32
    %16 = vector.broadcast %c0_i32 : i32 to vector<1x16xi32>
    %17 = arith.cmpi ne, %15, %16 : vector<1x16xi32>
    %cst_8 = arith.constant 9.99999984E+17 : f32
    %18 = vector.broadcast %cst_8 : f32 to vector<1x16xf32>
    %19 = arith.select %17, %14, %18 : vector<1x16xi1>, vector<1x16xf32>
    %c0_9 = arith.constant 0 : index
    %c0_10 = arith.constant 0 : index
    %20 = vector.load %arg4[%c0_9, %c0_10] : memref<1x16xf32, #tpu.memory_space<vmem>>, vector<1x16xf32>
    tpu.vector_store %arg4[%c0_9, %c0_10], %19 {strides = array<i32>} : memref<1x16xf32, #tpu.memory_space<vmem>>, vector<1x16xf32>,
    return
  }
  func.func @transform_0(%arg0: i32) -> (i32, i32) {
    %c0_i32 = arith.constant 0 : i32
    %c0_i32_0 = arith.constant 0 : i32
    return %arg0, %c0_i32 : i32, i32
  }
  func.func @transform_1(%arg0: i32) -> (i32, i32) {
    %c0_i32 = arith.constant 0 : i32
    %c0_i32_0 = arith.constant 0 : i32
    return %arg0, %c0_i32 : i32, i32
  }
  func.func @transform_2(%arg0: i32) -> (i32, i32) {
    %c0_i32 = arith.constant 0 : i32
    %c0_i32_0 = arith.constant 0 : i32
    return %c0_i32, %arg0 : i32, i32
  }
  func.func @transform_3(%arg0: i32) -> (i32, i32) {
    %c0_i32 = arith.constant 0 : i32
    %c0_i32_0 = arith.constant 0 : i32
    return %c0_i32, %arg0 : i32, i32
  }
}

</mosaic_0001>

<llo_original>
// kernel: tpu_custom_call.1
$region0: #{tpu_custom_call.1}
  #allocation0 [shape = 'u32[]', space=smem, size = 0x4, offset = 0x4, fixed_abs, tag = 'smem constant byte address 0x4 - core index']
  #allocation1 [shape = 'u32[144,128]{1,0:T(1,128)}', space=vmem, size = 0x12000, scoped, tag = 'internal scratch']
  %s0 = inlined_call_operand.vmem [shape: f32[16,32], index: 0, kind: input, shape index: {}]
  %s1 = inlined_call_operand.vmem [shape: f32[16,1], index: 1, kind: input, shape index: {}]
  %s2 = inlined_call_operand.vmem [shape: s32[1,16], index: 2, kind: input, shape index: {}]
  %s3 = inlined_call_operand.hbm [shape: f32[1,16], index: 3, kind: output, shape index: {}]
  %s4 = sld [smem:[#allocation0]]
  $region22: #{tpu_custom_call.1} parent=0
    _
  %s6 = ssub.s32 1, %s4
  %s7 = scalar_select 0, %s6, %s4
  $region1: #{tpu_custom_call.1} parent=0
    #allocation2 [shape = 'u8[512]{0}', space=vmem, size = 0x400, scoped, tag = 'output window, operand 0, single buffered']
    #allocation3 [shape = 's32[1]{0}', space=sflag, size = 0x4, scoped, tag = 'scoped memory for tpu_custom_call.1']
    %8 = vsyncpa [#allocation3], 0
    // Predicated region
    $region2: #{tpu_custom_call.1} parent=1 // pred_check
      _
    $region3: #{tpu_custom_call.1} parent=1 // pred_check_branch
      %10 = sbr.rel (0) target = $region5
    $region4: #{tpu_custom_call.1} parent=1 // pred_region
      _
    $region5: #{tpu_custom_call.1} parent=1 // pred_fallthru
      _
    // Predicated region
    $region6: #{tpu_custom_call.1} parent=1 // pred_check
      _
    $region7: #{tpu_custom_call.1} parent=1 // pred_check_branch
      %12 = sbr.rel (0) target = $region9
    $region8: #{tpu_custom_call.1} parent=1 // pred_region
      _
    $region9: #{tpu_custom_call.1} parent=1 // pred_fallthru
      _
    // Predicated region
    $region10: #{tpu_custom_call.1} parent=1 // pred_check
      _
    $region11: #{tpu_custom_call.1} parent=1 // pred_check_branch
      %14 = sbr.rel (0) target = $region13
    $region12: #{tpu_custom_call.1} parent=1 // pred_region
      _
    $region13: #{tpu_custom_call.1} parent=1 // pred_fallthru
      _
    %v15 = vld [vmem:[%s0] sm:$0xff]
    %v16 = vld [vmem:[%s0 + $0x8] sm:$0xff]
    %v17 = vld [vmem:[%s1] sm:$0xff]
    %v18 = vld [vmem:[%s1 + $0x8] sm:$0xff]
    %20 = vset.pattern.permute.xlu0 0
    %21 = vperm.xlu0 %20, %v17
    %v22 = vpop.permute.xlu0 %21
    %25 = vset.pattern.permute.xlu0 0
    %26 = vperm.xlu0 %25, %v18
    %v27 = vpop.permute.xlu0 %26
    %v29 = vsub.f32 %v15, %v22
    %v30 = vsub.f32 %v16, %v27
    %v31 = vmul.f32 %v29, %v29
    %v32 = vmul.f32 %v30, %v30
    %v33 = vpack.c.bf16 %v32, %v31
    %v34 = vunpack.c.l.bf16 %v33
    %v35 = vunpack.c.h.bf16 %v33
    %v36 = vsub.f32 %v31, %v34
    %v37 = vsub.f32 %v32, %v35
    %vm38 = vcmask 261120
    %v40 = vsel %vm38, 1.0, 0
    %v43 = vsel %vm38, %v36, 0
    %v46 = vsel %vm38, %v37, 0
    %48 = vmatprep.subr.mxu0 0.0
    %49 = vmatpush1.xpose.msra.mxu0 %v43
    %50 = vmatprep.subr.mxu0 0.0
    %51 = vmatpush1.xpose.msra.mxu0 %v46
    %52 = vmatprep.subr.mxu0 0.0
    %53 = vmatpush1.xpose.msra.mxu0 0.0
    %54 = vmatprep.subr.mxu0 0.0
    %55 = vmatpush1.xpose.msra.mxu0 0.0
    %56 = vmatprep.subr.mxu0 0.0
    %57 = vmatpush1.xpose.msra.mxu0 0.0
    %58 = vmatprep.subr.mxu0 0.0
    %59 = vmatpush1.xpose.msra.mxu0 0.0
    %60 = vmatprep.subr.mxu0 0.0
    %61 = vmatpush1.xpose.msra.mxu0 0.0
    %62 = vmatprep.subr.mxu0 0.0
    %63 = vmatpush1.xpose.msra.mxu0 0.0
    %64 = vmatprep.subr.mxu0 0.0
    %65 = vmatpush1.xpose.msra.mxu0 0.0
    %66 = vmatprep.subr.mxu0 0.0
    %67 = vmatpush1.xpose.msra.mxu0 0.0
    %68 = vmatprep.subr.mxu0 0.0
    %69 = vmatpush1.xpose.msra.mxu0 0.0
    %70 = vmatprep.subr.mxu0 0.0
    %71 = vmatpush1.xpose.msra.mxu0 0.0
    %72 = vmatprep.subr.mxu0 0.0
    %73 = vmatpush1.xpose.msra.mxu0 0.0
    %74 = vmatprep.subr.mxu0 0.0
    %75 = vmatpush1.xpose.msra.mxu0 0.0
    %76 = vmatprep.subr.mxu0 0.0
    %77 = vmatpush1.xpose.msra.mxu0 0.0
    %78 = vmatprep.subr.mxu0 0.0
    %79 = vmatpush1.xpose.msra.mxu0 0.0
    %80 = vmatprep.subr.mxu0 0.0
    %81 = vmatpush1.xpose.msra.mxu0 0.0
    %82 = vmatprep.subr.mxu0 0.0
    %83 = vmatpush1.xpose.msra.mxu0 0.0
    %84 = vmatprep.subr.mxu0 0.0
    %85 = vmatpush1.xpose.msra.mxu0 0.0
    %86 = vmatprep.subr.mxu0 0.0
    %87 = vmatpush1.xpose.msra.mxu0 0.0
    %88 = vmatprep.subr.mxu0 0.0
    %89 = vmatpush1.xpose.msra.mxu0 0.0
    %90 = vmatprep.subr.mxu0 0.0
    %91 = vmatpush1.xpose.msra.mxu0 0.0
    %92 = vmatprep.subr.mxu0 0.0
    %93 = vmatpush1.xpose.msra.mxu0 0.0
    %94 = vmatprep.subr.mxu0 0.0
    %95 = vmatpush1.xpose.msra.mxu0 0.0
    %96 = vmatprep.subr.mxu0 0.0
    %97 = vmatpush1.xpose.msra.mxu0 0.0
    %98 = vmatprep.subr.mxu0 0.0
    %99 = vmatpush1.xpose.msra.mxu0 0.0
    %100 = vmatprep.subr.mxu0 0.0
    %101 = vmatpush1.xpose.msra.mxu0 0.0
    %102 = vmatprep.subr.mxu0 0.0
    %103 = vmatpush1.xpose.msra.mxu0 0.0
    %104 = vmatprep.subr.mxu0 0.0
    %105 = vmatpush1.xpose.msra.mxu0 0.0
    %106 = vmatprep.subr.mxu0 0.0
    %107 = vmatpush1.xpose.msra.mxu0 0.0
    %108 = vmatprep.subr.mxu0 0.0
    %109 = vmatpush1.xpose.msra.mxu0 0.0
    %110 = vmatprep.subr.mxu0 0.0
    %111 = vmatpush1.xpose.msra.mxu0 0.0
    %112 = vmatprep.mubr.f32.mxu0 0.0
    %113 = vmatmul.mubr.f32.gmra.mrb[0].mxu0 %v40
    %v114 = vpop.f32.mrb[0].mxu0
    %v115 = vadd.f32 0.0, %v114
    %v116 = vpop.f32.mrb[0].mxu0
    %117 = vdwg.mxu0
    %v119 = vsel %vm38, %v34, 0
    %v122 = vsel %vm38, %v35, 0
    %124 = vmatprep.subr.mxu0 0.0
    %125 = vmatpush1.xpose.msra.mxu0 %v119
    %126 = vmatprep.subr.mxu0 0.0
    %127 = vmatpush1.xpose.msra.mxu0 %v122
    %128 = vmatprep.subr.mxu0 0.0
    %129 = vmatpush1.xpose.msra.mxu0 0.0
    %130 = vmatprep.subr.mxu0 0.0
    %131 = vmatpush1.xpose.msra.mxu0 0.0
    %132 = vmatprep.subr.mxu0 0.0
    %133 = vmatpush1.xpose.msra.mxu0 0.0
    %134 = vmatprep.subr.mxu0 0.0
    %135 = vmatpush1.xpose.msra.mxu0 0.0
    %136 = vmatprep.subr.mxu0 0.0
    %137 = vmatpush1.xpose.msra.mxu0 0.0
    %138 = vmatprep.subr.mxu0 0.0
    %139 = vmatpush1.xpose.msra.mxu0 0.0
    %140 = vmatprep.subr.mxu0 0.0
    %141 = vmatpush1.xpose.msra.mxu0 0.0
    %142 = vmatprep.subr.mxu0 0.0
    %143 = vmatpush1.xpose.msra.mxu0 0.0
    %144 = vmatprep.subr.mxu0 0.0
    %145 = vmatpush1.xpose.msra.mxu0 0.0
    %146 = vmatprep.subr.mxu0 0.0
    %147 = vmatpush1.xpose.msra.mxu0 0.0
    %148 = vmatprep.subr.mxu0 0.0
    %149 = vmatpush1.xpose.msra.mxu0 0.0
    %150 = vmatprep.subr.mxu0 0.0
    %151 = vmatpush1.xpose.msra.mxu0 0.0
    %152 = vmatprep.subr.mxu0 0.0
    %153 = vmatpush1.xpose.msra.mxu0 0.0
    %154 = vmatprep.subr.mxu0 0.0
    %155 = vmatpush1.xpose.msra.mxu0 0.0
    %156 = vmatprep.subr.mxu0 0.0
    %157 = vmatpush1.xpose.msra.mxu0 0.0
    %158 = vmatprep.subr.mxu0 0.0
    %159 = vmatpush1.xpose.msra.mxu0 0.0
    %160 = vmatprep.subr.mxu0 0.0
    %161 = vmatpush1.xpose.msra.mxu0 0.0
    %162 = vmatprep.subr.mxu0 0.0
    %163 = vmatpush1.xpose.msra.mxu0 0.0
    %164 = vmatprep.subr.mxu0 0.0
    %165 = vmatpush1.xpose.msra.mxu0 0.0
    %166 = vmatprep.subr.mxu0 0.0
    %167 = vmatpush1.xpose.msra.mxu0 0.0
    %168 = vmatprep.subr.mxu0 0.0
    %169 = vmatpush1.xpose.msra.mxu0 0.0
    %170 = vmatprep.subr.mxu0 0.0
    %171 = vmatpush1.xpose.msra.mxu0 0.0
    %172 = vmatprep.subr.mxu0 0.0
    %173 = vmatpush1.xpose.msra.mxu0 0.0
    %174 = vmatprep.subr.mxu0 0.0
    %175 = vmatpush1.xpose.msra.mxu0 0.0
    %176 = vmatprep.subr.mxu0 0.0
    %177 = vmatpush1.xpose.msra.mxu0 0.0
    %178 = vmatprep.subr.mxu0 0.0
    %179 = vmatpush1.xpose.msra.mxu0 0.0
    %180 = vmatprep.subr.mxu0 0.0
    %181 = vmatpush1.xpose.msra.mxu0 0.0
    %182 = vmatprep.subr.mxu0 0.0
    %183 = vmatpush1.xpose.msra.mxu0 0.0
    %184 = vmatprep.subr.mxu0 0.0
    %185 = vmatpush1.xpose.msra.mxu0 0.0
    %186 = vmatprep.subr.mxu0 0.0
    %187 = vmatpush1.xpose.msra.mxu0 0.0
    %188 = vmatprep.mubr.f32.mxu0 0.0
    %189 = vmatmul.mubr.f32.gmra.mrb[0].mxu0 %v40
    %v190 = vpop.f32.mrb[0].mxu0
    %v191 = vadd.f32 %v115, %v190
    %v192 = vpop.f32.mrb[0].mxu0
    %193 = vdwg.mxu0
    %v194 = vmax.f32 %v191, 0.0
    %v195 = vrsqrt.pop %v194
    %v196 = vmul.f32 %v194, %v195
    %vm197 = vcmp.eq.f32.partialorder %v194, inf
    %v198 = vsel %vm197, %v194, %v196
    %vm199 = vcmp.eq.f32.partialorder %v194, 0.0
    %v200 = vand.u32 %v194, 2147483648
    %v201 = vsel %vm199, %v200, %v198
    %v202 = vld [vmem:[%s2] sm:$0x1]
    %vm203 = vcmp.ne.s32.totalorder %v202, 0
    %v204 = vsel %vm203, %v201, 1e+18
    %vm205 = vcmask 122880
    %206 = vst.msk [vmem:[#allocation2] sm:$0x1] %vm205, %v204
    // Predicated region
    $region14: #{tpu_custom_call.1} parent=1 // pred_check
      _
    $region15: #{tpu_custom_call.1} parent=1 // pred_check_branch
      %208 = sbr.rel (0) target = $region17
    $region16: #{tpu_custom_call.1} parent=1 // pred_region
      %s210 = ssub.s32 16, 16
      %211 = vsyncadd [#allocation3], %s210
      %s213 = sshll.u32 [#allocation2], 4
      %s214 = int_to_ptr.vmem [resolvable:$true] %s213
      %216 = dma.vmem_to_hbm [thread:$0]  %s214, 16, %s3, [#allocation3]
    $region17: #{tpu_custom_call.1} parent=1 // pred_fallthru
      _
    // Predicated region
    $region18: #{tpu_custom_call.1} parent=1 // pred_check
      _
    $region19: #{tpu_custom_call.1} parent=1 // pred_check_branch
      %218 = sbr.rel (0) target = $region21
    $region20: #{tpu_custom_call.1} parent=1 // pred_region
      %219 = dma.done [#allocation3], 16
    $region21: #{tpu_custom_call.1} parent=1 // pred_fallthru
      _
    %220 = vsyncpa [#allocation3], 1

</llo_original>
